<compile_context>
chip_gen: v7x
topology: tpu7x:2x2x1
jax: 0.10.0
libtpu: 0.0.40
codegen_flags: <defaults>
</compile_context>

<pallas_src>
import functools

import jax
import jax.numpy as jnp
from jax.experimental import pallas as pl
from jax.experimental.pallas import tpu as pltpu

_LANE = 128
_VMEM_BUDGET = 48 * 1024 * 1024  # conservative; also holds on v7x (64 MiB)


def _round_up(n, m):
    return ((n + m - 1) // m) * m


def _step_bytes(batch, width, itemsize):
    # Double-buffered (B, width) input + output tile plus a few (1, width) rows.
    return 2 * (2 * batch * width * max(itemsize, 4) + 6 * width * 4)


def _choose_tiling(batch, d, itemsize):
    """Pick the feature-tile width. Returns (td, d_pad, needs_pad)."""
    if d % _LANE == 0:
        td = _LANE
        for cand in range(min(1024, d), _LANE - 1, -_LANE):
            if _step_bytes(batch, cand, itemsize) <= _VMEM_BUDGET:
                td = cand
                break
        return td, d, False
    if _step_bytes(batch, d, itemsize) <= _VMEM_BUDGET:
        # Small lane-unaligned feature count: one full-extent tile, no pad/slice
        # HBM copies (output stores are masked but the array is tiny).
        return d, d, False
    # Large lane-unaligned D: pad features up to a lane multiple and tile.
    td = _LANE
    for cand in range(min(1024, _round_up(d, _LANE)), _LANE - 1, -_LANE):
        if _step_bytes(batch, cand, itemsize) <= _VMEM_BUDGET:
            td = cand
            break
    # TODO(synk): if even td=128 does not fit (B in the hundreds of thousands),
    # add a second "arbitrary" grid axis over B with sum / sum-of-squares
    # accumulators (two-pass variant, ~1.5x HBM traffic).
    return td, _round_up(d, td), True


def _vmem_limit(batch, td, itemsize):
    return int(min(64 * 1024 * 1024,
                   max(_step_bytes(batch, td, itemsize) + (4 << 20), 16 << 20)))


# ----------------------------------------------------------------------------
# Kernels
# ----------------------------------------------------------------------------
def _bnflow_stats_kernel(x_ref, lg_ref, beta_ref, y_ref, mean_ref, var_ref, *,
                         eps, inv_b):
    """One (B, TD) feature tile: batch stats + normalize + affine."""
    x = x_ref[...].astype(jnp.float32)                          # (B, TD)

    mean = jnp.sum(x, axis=0, keepdims=True) * inv_b            # (1, TD)
    centered = x - mean
    var = jnp.sum(centered * centered, axis=0, keepdims=True) * inv_b + eps

    inv_std = jax.lax.rsqrt(var)                                # EUP
    gamma = jnp.exp(lg_ref[...])                                # (1, TD) f32
    scale = inv_std * gamma                                     # (1, TD)

    y_ref[...] = (centered * scale + beta_ref[...]).astype(y_ref.dtype)
    mean_ref[...] = mean
    var_ref[...] = var


def _bnflow_apply_kernel(x_ref, lg_ref, beta_ref, mean_ref, var_ref, y_ref, *,
                         inverse):
    """Elementwise path when mean/var are given (eval 'direct' or 'inverse')."""
    x = x_ref[...].astype(jnp.float32)                          # (B, TD)
    if inverse:
        x_hat = (x - beta_ref[...]) * jnp.exp(-lg_ref[...])
        y = x_hat * jnp.sqrt(var_ref[...]) + mean_ref[...]
    else:
        scale = jnp.exp(lg_ref[...]) * jax.lax.rsqrt(var_ref[...])
        y = (x - mean_ref[...]) * scale + beta_ref[...]
    y_ref[...] = y.astype(y_ref.dtype)


# ----------------------------------------------------------------------------
# Wrappers
# ----------------------------------------------------------------------------
def batch_norm_flow_direct_train(x, log_gamma, beta, eps=1e-5,
                                 return_stats=False):
    """Training-mode 'direct' forward of BatchNormFlow.

    Returns (y, logdet) or (y, logdet, batch_mean, batch_var)."""
    B, D = x.shape
    itemsize = jnp.dtype(x.dtype).itemsize
    td, d_pad, needs_pad = _choose_tiling(B, D, itemsize)
    grid = (d_pad // td,)

    lg2 = log_gamma.reshape(1, D).astype(jnp.float32)
    bt2 = beta.reshape(1, D).astype(jnp.float32)
    if needs_pad:
        pad = ((0, 0), (0, d_pad - D))
        x_p = jnp.pad(x, pad)
        lg_p = jnp.pad(lg2, pad)
        bt_p = jnp.pad(bt2, pad)
    else:
        x_p, lg_p, bt_p = x, lg2, bt2

    cost = pl.CostEstimate(
        flops=7 * B * d_pad + 4 * d_pad,
        transcendentals=2 * d_pad,
        bytes_accessed=2 * B * d_pad * itemsize + 6 * d_pad * 4,
    )
    kernel = functools.partial(_bnflow_stats_kernel, eps=float(eps),
                               inv_b=1.0 / B)

    y_p, mean_p, var_p = pl.pallas_call(
        kernel,
        out_shape=(
            jax.ShapeDtypeStruct((B, d_pad), x.dtype),
            jax.ShapeDtypeStruct((1, d_pad), jnp.float32),
            jax.ShapeDtypeStruct((1, d_pad), jnp.float32),
        ),
        grid_spec=pl.GridSpec(
            grid=grid,
            in_specs=[
                pl.BlockSpec((B, td), lambda j: (0, j)),
                pl.BlockSpec((1, td), lambda j: (0, j)),
                pl.BlockSpec((1, td), lambda j: (0, j)),
            ],
            out_specs=[
                pl.BlockSpec((B, td), lambda j: (0, j)),
                pl.BlockSpec((1, td), lambda j: (0, j)),
                pl.BlockSpec((1, td), lambda j: (0, j)),
            ],
        ),
        compiler_params=pltpu.CompilerParams(
            dimension_semantics=("parallel",),
            vmem_limit_bytes=_vmem_limit(B, td, itemsize),
        ),
        cost_estimate=cost,
    )(x_p, lg_p, bt_p)

    y = y_p[:, :D] if needs_pad else y_p
    batch_mean = mean_p[0, :D]
    batch_var = var_p[0, :D]

    # Scalar log-det computed outside the kernel (tiny XLA reduction).
    logdet = jnp.sum(log_gamma.astype(jnp.float32) - 0.5 * jnp.log(batch_var),
                     axis=-1, keepdims=True)

    if return_stats:
        return y, logdet, batch_mean, batch_var
    return y, logdet


def batch_norm_flow_apply(x, log_gamma, beta, mean, var, inverse=False):
    """'direct' eval path (inverse=False) or 'inverse' path (inverse=True),
    with mean/var supplied (running or stored batch stats)."""
    B, D = x.shape
    itemsize = jnp.dtype(x.dtype).itemsize
    td, d_pad, needs_pad = _choose_tiling(B, D, itemsize)
    grid = (d_pad // td,)

    lg2 = log_gamma.reshape(1, D).astype(jnp.float32)
    bt2 = beta.reshape(1, D).astype(jnp.float32)
    mn2 = mean.reshape(1, D).astype(jnp.float32)
    vr2 = var.reshape(1, D).astype(jnp.float32)
    if needs_pad:
        pad = ((0, 0), (0, d_pad - D))
        x_p = jnp.pad(x, pad)
        lg_p = jnp.pad(lg2, pad)
        bt_p = jnp.pad(bt2, pad)
        mn_p = jnp.pad(mn2, pad)
        vr_p = jnp.pad(vr2, pad, constant_values=1.0)   # avoid rsqrt(0)
    else:
        x_p, lg_p, bt_p, mn_p, vr_p = x, lg2, bt2, mn2, vr2

    cost = pl.CostEstimate(
        flops=5 * B * d_pad + 3 * d_pad,
        transcendentals=2 * d_pad,
        bytes_accessed=2 * B * d_pad * itemsize + 4 * d_pad * 4,
    )
    kernel = functools.partial(_bnflow_apply_kernel, inverse=bool(inverse))

    y_p = pl.pallas_call(
        kernel,
        out_shape=jax.ShapeDtypeStruct((B, d_pad), x.dtype),
        grid_spec=pl.GridSpec(
            grid=grid,
            in_specs=[
                pl.BlockSpec((B, td), lambda j: (0, j)),
                pl.BlockSpec((1, td), lambda j: (0, j)),
                pl.BlockSpec((1, td), lambda j: (0, j)),
                pl.BlockSpec((1, td), lambda j: (0, j)),
                pl.BlockSpec((1, td), lambda j: (0, j)),
            ],
            out_specs=pl.BlockSpec((B, td), lambda j: (0, j)),
        ),
        compiler_params=pltpu.CompilerParams(
            dimension_semantics=("parallel",),
            vmem_limit_bytes=_vmem_limit(B, td, itemsize),
        ),
        cost_estimate=cost,
    )(x_p, lg_p, bt_p, mn_p, vr_p)

    y = y_p[:, :D] if needs_pad else y_p

    lg32 = log_gamma.astype(jnp.float32)
    half_logvar = 0.5 * jnp.log(var.astype(jnp.float32))
    if inverse:
        logdet = jnp.sum(-lg32 + half_logvar, axis=-1, keepdims=True)
    else:
        logdet = jnp.sum(lg32 - half_logvar, axis=-1, keepdims=True)
    return y, logdet


def update_running_stats(running_mean, running_var, batch_mean, batch_var,
                         momentum=0.0):
    """Functional equivalent of the module's in-place buffer update."""
    new_mean = running_mean * momentum + batch_mean * (1.0 - momentum)
    new_var = running_var * momentum + batch_var * (1.0 - momentum)
    return new_mean, new_var


# ----------------------------------------------------------------------------
# Self-test
# ----------------------------------------------------------------------------
if __name__ == "__main__":
    key = jax.random.PRNGKey(0)
    k_x, k_g, k_b = jax.random.split(key, 3)

    B, D = 8, 32  # batch, num_inputs
    eps = 1e-5

    x = jax.random.normal(k_x, (B, D), dtype=jnp.float32) * 2.0 + 0.5
    # Module __init__ uses zeros; use small deterministic nonzero params so the
    # affine path is actually exercised.
    log_gamma = 0.1 * jax.random.normal(k_g, (D,), dtype=jnp.float32)
    beta = 0.1 * jax.random.normal(k_b, (D,), dtype=jnp.float32)

    # ---- 'direct', training ------------------------------------------------
    y, logdet, bm, bv = batch_norm_flow_direct_train(
        x, log_gamma, beta, eps=eps, return_stats=True)
    jax.block_until_ready((y, logdet, bm, bv))

    xf = x.astype(jnp.float32)
    m_ref = jnp.mean(xf, axis=0)
    v_ref = jnp.mean((xf - m_ref) ** 2, axis=0) + eps
    y_ref = jnp.exp(log_gamma) * (xf - m_ref) / jnp.sqrt(v_ref) + beta
    logdet_ref = jnp.sum(log_gamma - 0.5 * jnp.log(v_ref), axis=-1,
                         keepdims=True)

    assert y.shape == (B, D)
    assert logdet.shape == (1,)
    assert jnp.allclose(y, y_ref, atol=1e-5, rtol=1e-5)
    assert jnp.allclose(logdet, logdet_ref, atol=1e-5, rtol=1e-5)
    assert jnp.allclose(bm, m_ref, atol=1e-5, rtol=1e-5)
    assert jnp.allclose(bv, v_ref, atol=1e-5, rtol=1e-5)

    # ---- running-stat update (module default momentum=0.0) ------------------
    rm, rv = update_running_stats(jnp.zeros((D,), jnp.float32),
                                  jnp.ones((D,), jnp.float32),
                                  bm, bv, momentum=0.0)
    assert jnp.allclose(rm, bm) and jnp.allclose(rv, bv)

    # ---- 'direct', eval (uses stored stats) ---------------------------------
    y_eval, logdet_eval = batch_norm_flow_apply(x, log_gamma, beta, rm, rv,
                                                inverse=False)
    jax.block_until_ready((y_eval, logdet_eval))
    assert jnp.allclose(y_eval, y_ref, atol=1e-5, rtol=1e-5)
    assert jnp.allclose(logdet_eval, logdet_ref, atol=1e-5, rtol=1e-5)

    # ---- 'inverse' (training stats): must recover x, negate logdet ----------
    x_rec, logdet_inv = batch_norm_flow_apply(y, log_gamma, beta, bm, bv,
                                              inverse=True)
    jax.block_until_ready((x_rec, logdet_inv))
    assert jnp.allclose(x_rec, x, atol=1e-4, rtol=1e-4)
    assert jnp.allclose(logdet_inv, -logdet_ref, atol=1e-5, rtol=1e-5)

    print("KERNEL_OK")
</pallas_src>

<mosaic_0001>
module attributes {stable_mosaic.version = 11 : i64} {
  func.func @_bnflow_stats_kernel(%arg0: i32, %arg1: memref<8x32xf32, #tpu.memory_space<vmem>>, %arg2: memref<1x32xf32, #tpu.memory_space<vmem>>, %arg3: memref<1x32xf32, #tpu.memory_space<vmem>>, %arg4: memref<8x32xf32, #tpu.memory_space<vmem>>, %arg5: memref<1x32xf32, #tpu.memory_space<vmem>>, %arg6: memref<1x32xf32, #tpu.memory_space<vmem>>) attributes {dimension_semantics = [#tpu.dimension_semantics<parallel>], iteration_bounds = array<i64: 1>, scalar_prefetch = 0 : i64, scratch_operands = 0 : i64, tpu.core_type = #tpu.core_type<tc>, window_params = [{transform_indices = @transform_0, window_bounds = array<i64: 8, 32>}, {transform_indices = @transform_1, window_bounds = array<i64: 1, 32>}, {transform_indices = @transform_2, window_bounds = array<i64: 1, 32>}, {transform_indices = @transform_3, window_bounds = array<i64: 8, 32>}, {transform_indices = @transform_4, window_bounds = array<i64: 1, 32>}, {transform_indices = @transform_5, window_bounds = array<i64: 1, 32>}]} {
    %c0 = arith.constant 0 : index
    %c0_0 = arith.constant 0 : index
    %0 = vector.load %arg1[%c0, %c0_0] : memref<8x32xf32, #tpu.memory_space<vmem>>, vector<8x32xf32>
    %cst = arith.constant dense<0.000000e+00> : vector<32xf32>
    %1 = vector.multi_reduction <add>, %0, %cst [0] : vector<8x32xf32> to vector<32xf32>
    %2 = vector.shape_cast %1 : vector<32xf32> to vector<1x32xf32>
    %cst_1 = arith.constant 1.250000e-01 : f32
    %3 = vector.broadcast %cst_1 : f32 to vector<1x32xf32>
    %4 = arith.mulf %2, %3 : vector<1x32xf32>
    %5 = vector.broadcast %4 : vector<1x32xf32> to vector<8x32xf32>
    %6 = arith.subf %0, %5 : vector<8x32xf32>
    %7 = arith.mulf %6, %6 : vector<8x32xf32>
    %cst_2 = arith.constant dense<0.000000e+00> : vector<32xf32>
    %8 = vector.multi_reduction <add>, %7, %cst_2 [0] : vector<8x32xf32> to vector<32xf32>
    %9 = vector.shape_cast %8 : vector<32xf32> to vector<1x32xf32>
    %cst_3 = arith.constant 1.250000e-01 : f32
    %10 = vector.broadcast %cst_3 : f32 to vector<1x32xf32>
    %11 = arith.mulf %9, %10 : vector<1x32xf32>
    %cst_4 = arith.constant 9.99999974E-6 : f32
    %12 = vector.broadcast %cst_4 : f32 to vector<1x32xf32>
    %13 = arith.addf %11, %12 : vector<1x32xf32>
    %14 = math.rsqrt %13 : vector<1x32xf32>
    %c0_5 = arith.constant 0 : index
    %c0_6 = arith.constant 0 : index
    %15 = vector.load %arg2[%c0_5, %c0_6] : memref<1x32xf32, #tpu.memory_space<vmem>>, vector<1x32xf32>
    %16 = math.exp %15 : vector<1x32xf32>
    %17 = arith.mulf %14, %16 : vector<1x32xf32>
    %18 = vector.broadcast %17 : vector<1x32xf32> to vector<8x32xf32>
    %19 = arith.mulf %6, %18 : vector<8x32xf32>
    %c0_7 = arith.constant 0 : index
    %c0_8 = arith.constant 0 : index
    %20 = vector.load %arg3[%c0_7, %c0_8] : memref<1x32xf32, #tpu.memory_space<vmem>>, vector<1x32xf32>
    %21 = vector.broadcast %20 : vector<1x32xf32> to vector<8x32xf32>
    %22 = arith.addf %19, %21 : vector<8x32xf32>
    %c0_9 = arith.constant 0 : index
    %c0_10 = arith.constant 0 : index
    %23 = vector.load %arg4[%c0_9, %c0_10] : memref<8x32xf32, #tpu.memory_space<vmem>>, vector<8x32xf32>
    tpu.vector_store %arg4[%c0_9, %c0_10], %22 {strides = array<i32>} : memref<8x32xf32, #tpu.memory_space<vmem>>, vector<8x32xf32>,
    %c0_11 = arith.constant 0 : index
    %c0_12 = arith.constant 0 : index
    %24 = vector.load %arg5[%c0_11, %c0_12] : memref<1x32xf32, #tpu.memory_space<vmem>>, vector<1x32xf32>
    tpu.vector_store %arg5[%c0_11, %c0_12], %4 {strides = array<i32>} : memref<1x32xf32, #tpu.memory_space<vmem>>, vector<1x32xf32>,
    %c0_13 = arith.constant 0 : index
    %c0_14 = arith.constant 0 : index
    %25 = vector.load %arg6[%c0_13, %c0_14] : memref<1x32xf32, #tpu.memory_space<vmem>>, vector<1x32xf32>
    tpu.vector_store %arg6[%c0_13, %c0_14], %13 {strides = array<i32>} : memref<1x32xf32, #tpu.memory_space<vmem>>, vector<1x32xf32>,
    return
  }
  func.func @transform_0(%arg0: i32) -> (i32, i32) {
    %c0_i32 = arith.constant 0 : i32
    %c0_i32_0 = arith.constant 0 : i32
    return %c0_i32, %arg0 : i32, i32
  }
  func.func @transform_1(%arg0: i32) -> (i32, i32) {
    %c0_i32 = arith.constant 0 : i32
    %c0_i32_0 = arith.constant 0 : i32
    return %c0_i32, %arg0 : i32, i32
  }
  func.func @transform_2(%arg0: i32) -> (i32, i32) {
    %c0_i32 = arith.constant 0 : i32
    %c0_i32_0 = arith.constant 0 : i32
    return %c0_i32, %arg0 : i32, i32
  }
  func.func @transform_3(%arg0: i32) -> (i32, i32) {
    %c0_i32 = arith.constant 0 : i32
    %c0_i32_0 = arith.constant 0 : i32
    return %c0_i32, %arg0 : i32, i32
  }
  func.func @transform_4(%arg0: i32) -> (i32, i32) {
    %c0_i32 = arith.constant 0 : i32
    %c0_i32_0 = arith.constant 0 : i32
    return %c0_i32, %arg0 : i32, i32
  }
  func.func @transform_5(%arg0: i32) -> (i32, i32) {
    %c0_i32 = arith.constant 0 : i32
    %c0_i32_0 = arith.constant 0 : i32
    return %c0_i32, %arg0 : i32, i32
  }
}

</mosaic_0001>

<llo_original>
// kernel: tpu_custom_call.1
$region0: #{tpu_custom_call.1}
  #allocation0 [shape = 'u32[]', space=smem, size = 0x4, offset = 0x4, fixed_abs, tag = 'smem constant byte address 0x4 - core index']
  #allocation1 [shape = 'u32[144,128]{1,0:T(1,128)}', space=vmem, size = 0x12000, scoped, tag = 'internal scratch']
  %s0 = inlined_call_operand.hbm [shape: f32[8,32], index: 0, kind: input, shape index: {}]
  %s1 = inlined_call_operand.vmem [shape: f32[1,32], index: 1, kind: input, shape index: {}]
  %s2 = inlined_call_operand.vmem [shape: f32[1,32], index: 2, kind: input, shape index: {}]
  %s3 = inlined_call_operand.hbm [shape: f32[8,32], index: 3, kind: output, shape index: {0}]
  %s4 = inlined_call_operand.hbm [shape: f32[1,32], index: 4, kind: output, shape index: {1}]
  %s5 = inlined_call_operand.hbm [shape: f32[1,32], index: 5, kind: output, shape index: {2}]
  %6 = xla_tuple %s3, %s4, %s5
  %s7 = sld [smem:[#allocation0]]
  $region42: #{tpu_custom_call.1} parent=0
    _
  %s9 = ssub.s32 1, %s7
  %s10 = scalar_select 0, %s9, %s7
  $region1: #{tpu_custom_call.1} parent=0
    #allocation2 [shape = 'u8[4096]{0}', space=vmem, size = 0x1000, scoped, tag = 'input window, operand 0, single buffered']
    #allocation3 [shape = 's32[1]{0}', space=sflag, size = 0x4, scoped, tag = 'scoped memory for tpu_custom_call.1']
    #allocation4 [shape = 's32[1]{0}', space=sflag, size = 0x4, scoped, tag = 'scoped memory for tpu_custom_call.1']
    #allocation5 [shape = 'u8[4096]{0}', space=vmem, size = 0x1000, scoped, tag = 'output window, operand 0, single buffered']
    #allocation6 [shape = 'u8[512]{0}', space=vmem, size = 0x400, scoped, tag = 'output window, operand 1, single buffered']
    #allocation7 [shape = 's32[1]{0}', space=sflag, size = 0x4, scoped, tag = 'scoped memory for tpu_custom_call.1']
    #allocation8 [shape = 'u8[512]{0}', space=vmem, size = 0x400, scoped, tag = 'output window, operand 2, single buffered']
    %11 = vsyncpa [#allocation3], 0
    %12 = vsyncpa [#allocation4], 0
    %13 = vsyncpa [#allocation7], 0
    // Predicated region
    $region2: #{tpu_custom_call.1} parent=1 // pred_check
      _
    $region3: #{tpu_custom_call.1} parent=1 // pred_check_branch
      %15 = sbr.rel (0) target = $region5
    $region4: #{tpu_custom_call.1} parent=1 // pred_region
      %s17 = ssub.s32 128, 128
      %18 = vsyncadd [#allocation3], %s17
      %s20 = sshll.u32 [#allocation2], 4
      %s21 = int_to_ptr.vmem [resolvable:$true] %s20
      %23 = dma.hbm_to_vmem [thread:$0]  %s0, 128, %s21, [#allocation3]
    $region5: #{tpu_custom_call.1} parent=1 // pred_fallthru
      _
    // Predicated region
    $region6: #{tpu_custom_call.1} parent=1 // pred_check
      _
    $region7: #{tpu_custom_call.1} parent=1 // pred_check_branch
      %25 = sbr.rel (0) target = $region9
    $region8: #{tpu_custom_call.1} parent=1 // pred_region
      _
    $region9: #{tpu_custom_call.1} parent=1 // pred_fallthru
      _
    // Predicated region
    $region10: #{tpu_custom_call.1} parent=1 // pred_check
      _
    $region11: #{tpu_custom_call.1} parent=1 // pred_check_branch
      %27 = sbr.rel (0) target = $region13
    $region12: #{tpu_custom_call.1} parent=1 // pred_region
      _
    $region13: #{tpu_custom_call.1} parent=1 // pred_fallthru
      _
    // Predicated region
    $region14: #{tpu_custom_call.1} parent=1 // pred_check
      _
    $region15: #{tpu_custom_call.1} parent=1 // pred_check_branch
      %29 = sbr.rel (0) target = $region17
    $region16: #{tpu_custom_call.1} parent=1 // pred_region
      %30 = dma.done [#allocation3], 128
    $region17: #{tpu_custom_call.1} parent=1 // pred_fallthru
      _
    %v31 = vld [vmem:[#allocation2] sm:$0xff]
    %vm32 = vcmask 261120
    %v33 = vsel %vm32, %v31, 0.0
    %v34 = vrot.slane %v33, 4
    %v35 = vadd.f32 %v33, %v34
    %v36 = vrot.slane %v35, 2
    %v37 = vadd.f32 %v35, %v36
    %v38 = vrot.slane %v37, 1
    %v39 = vadd.f32 %v37, %v38
    %v40 = vmul.f32 %v39, 0.125
    %v41 = vsub.f32 %v31, %v40
    %v42 = vmul.f32 %v41, %v41
    %v43 = vsel %vm32, %v42, 0.0
    %v44 = vrot.slane %v43, 4
    %v45 = vadd.f32 %v43, %v44
    %v46 = vrot.slane %v45, 2
    %v47 = vadd.f32 %v45, %v46
    %v48 = vrot.slane %v47, 1
    %v49 = vadd.f32 %v47, %v48
    %v50 = vmul.f32 %v49, 0.125
    %v51 = vadd.f32 %v50, 1e-05
    %v52 = vrsqrt.pop %v51
    %v53 = vld [vmem:[%s1] sm:$0x1]
    %v54 = vmul.f32 %v53, 1.442695
    %v55 = vpow.pop %v54
    %v56 = vmul.f32 %v52, %v55
    %v57 = vlaneseq
    %v58 = vshrl.u32 %v57, 7
    %v59 = vsub.s32 0, %v58
    %v60 = vrot.slane %v56, %v59
    %v61 = vmul.f32 %v41, %v60
    %v62 = vld [vmem:[%s2] sm:$0x1]
    %v64 = vlaneseq
    %v65 = vshrl.u32 %v64, 7
    %v66 = vsub.s32 0, %v65
    %v67 = vrot.slane %v62, %v66
    %v69 = vadd.f32 %v61, %v67
    %70 = vst.msk [vmem:[#allocation5] sm:$0xff] %vm32, %v69
    %vm71 = vcmask 253952
    %72 = vst.msk [vmem:[#allocation6] sm:$0x1] %vm71, %v40
    %73 = vst.msk [vmem:[#allocation8] sm:$0x1] %vm71, %v51
    // Predicated region
    $region18: #{tpu_custom_call.1} parent=1 // pred_check
      _
    $region19: #{tpu_custom_call.1} parent=1 // pred_check_branch
      %75 = sbr.rel (0) target = $region21
    $region20: #{tpu_custom_call.1} parent=1 // pred_region
      %s77 = ssub.s32 128, 128
      %78 = vsyncadd [#allocation4], %s77
      %s80 = sshll.u32 [#allocation5], 4
      %s81 = int_to_ptr.vmem [resolvable:$true] %s80
      %83 = dma.vmem_to_hbm [thread:$0]  %s81, 128, %s3, [#allocation4]
    $region21: #{tpu_custom_call.1} parent=1 // pred_fallthru
      _
    // Predicated region
    $region22: #{tpu_custom_call.1} parent=1 // pred_check
      _
    $region23: #{tpu_custom_call.1} parent=1 // pred_check_branch
      %85 = sbr.rel (0) target = $region25
    $region24: #{tpu_custom_call.1} parent=1 // pred_region
      %s87 = ssub.s32 16, 16
      %88 = vsyncadd [#allocation7], %s87
      %s90 = sshll.u32 [#allocation6], 4
      %s91 = int_to_ptr.vmem [resolvable:$true] %s90
      %93 = dma.vmem_to_hbm [thread:$0]  %s91, 16, %s4, [#allocation7]
    $region25: #{tpu_custom_call.1} parent=1 // pred_fallthru
      _
    // Predicated region
    $region26: #{tpu_custom_call.1} parent=1 // pred_check
      _
    $region27: #{tpu_custom_call.1} parent=1 // pred_check_branch
      %95 = sbr.rel (0) target = $region29
    $region28: #{tpu_custom_call.1} parent=1 // pred_region
      %s97 = ssub.s32 16, 16
      %98 = vsyncadd [#allocation7], %s97
      %s100 = sshll.u32 [#allocation8], 4
      %s101 = int_to_ptr.vmem [resolvable:$true] %s100
      %103 = dma.vmem_to_hbm [thread:$0]  %s101, 16, %s5, [#allocation7]
    $region29: #{tpu_custom_call.1} parent=1 // pred_fallthru
      _
    // Predicated region
    $region30: #{tpu_custom_call.1} parent=1 // pred_check
      _
    $region31: #{tpu_custom_call.1} parent=1 // pred_check_branch
      %105 = sbr.rel (0) target = $region33
    $region32: #{tpu_custom_call.1} parent=1 // pred_region
      %106 = dma.done [#allocation4], 128
    $region33: #{tpu_custom_call.1} parent=1 // pred_fallthru
      _
    // Predicated region
    $region34: #{tpu_custom_call.1} parent=1 // pred_check
      _
    $region35: #{tpu_custom_call.1} parent=1 // pred_check_branch
      %108 = sbr.rel (0) target = $region37
    $region36: #{tpu_custom_call.1} parent=1 // pred_region
      %109 = dma.done [#allocation7], 16
    $region37: #{tpu_custom_call.1} parent=1 // pred_fallthru
      _
    // Predicated region
    $region38: #{tpu_custom_call.1} parent=1 // pred_check
      _
    $region39: #{tpu_custom_call.1} parent=1 // pred_check_branch
      %111 = sbr.rel (0) target = $region41
    $region40: #{tpu_custom_call.1} parent=1 // pred_region
      %112 = dma.done [#allocation7], 16
    $region41: #{tpu_custom_call.1} parent=1 // pred_fallthru
      _
    %113 = vsyncpa [#allocation3], 1
    %114 = vsyncpa [#allocation4], 1
    %115 = vsyncpa [#allocation7], 1

</llo_original>
